<compile_context>
chip_gen: v7x
topology: tpu7x:2x2x1
jax: 0.10.0
libtpu: 0.0.40
codegen_flags: <defaults>
</compile_context>

<pallas_src>
import jax
import jax.numpy as jnp
from jax.experimental import pallas as pl
from jax.experimental.pallas import tpu as pltpu

EPS = 1e-5  # nn.BatchNorm2d default
_LANES = 128
_MAX_TILE_SUBLANES = 4096          # ~2 MiB f32 per block
_VMEM_LIMIT = 32 * 1024 * 1024     # safe on v5e / v6e / v7x


def _stats_kernel(x_ref, part_ref):
    """Accumulate per-(n,c)-row sum and sum-of-squares over spatial tiles."""
    s = pl.program_id(1)

    @pl.when(s == 0)
    def _():
        part_ref[...] = jnp.zeros_like(part_ref)

    x = x_ref[...].astype(jnp.float32)                          # (TS, 128)
    part_ref[0:1, :] += jnp.sum(x, axis=0, keepdims=True)       # sum
    part_ref[1:2, :] += jnp.sum(x * x, axis=0, keepdims=True)   # sum of squares


def _normalize_kernel(scale_ref, bias_ref, x_ref, o_ref):
    """y = x * scale[row] + bias[row]  (single FMA per element)."""
    r = pl.program_id(0)
    scale = scale_ref[r]                                        # SMEM scalar
    bias = bias_ref[r]
    x = x_ref[...].astype(jnp.float32)
    o_ref[...] = (x * scale + bias).astype(o_ref.dtype)


def _pick_tile_sublanes(g, max_ts=_MAX_TILE_SUBLANES):
    """Largest legal sublane tile: full axis if small, else a multiple-of-8 divisor."""
    if g <= max_ts:
        return g
    ts = (max_ts // 8) * 8
    while ts >= 8:
        if g % ts == 0:
            return ts
        ts -= 8
    return g  # no multiple-of-8 divisor; fall back to full axis


def batch_norm_forward(x, gamma, beta, *, use_bn=True, use_ibn=False):
    """Forward pass of the PyTorch `batch_norm` module (default: use_bn=True)."""
    if not use_bn:
        if use_ibn:
            raise NotImplementedError("IBN path not implemented")  # TODO(synk)
        return x

    N, C, H, W = x.shape
    R = N * C
    L = H * W
    Lp = ((L + _LANES - 1) // _LANES) * _LANES

    x2d = x.reshape(R, L)                       # free reshape of NCHW (no transpose)
    if Lp != L:
        # zero padding does not perturb sum / sum-of-squares (true count used below)
        x2d = jnp.pad(x2d, ((0, 0), (0, Lp - L)))
    G = Lp // _LANES
    TS = _pick_tile_sublanes(G)
    S = G // TS
    x3d = x2d.reshape(R, G, _LANES)             # free reshape: spatial on sublanes+lanes

    # ---- pass 1: per-row sum / sumsq (one streaming read of x) ----
    partials = pl.pallas_call(
        _stats_kernel,
        out_shape=jax.ShapeDtypeStruct((R, 2, _LANES), jnp.float32),
        grid=(R, S),
        in_specs=[pl.BlockSpec((None, TS, _LANES), lambda r, s: (r, s, 0))],
        out_specs=pl.BlockSpec((None, 2, _LANES), lambda r, s: (r, 0, 0)),
        compiler_params=pltpu.CompilerParams(
            dimension_semantics=("parallel", "arbitrary"),
            vmem_limit_bytes=_VMEM_LIMIT,
        ),
    )(x3d)

    # ---- tiny per-channel combine + fused scale/bias (plain JAX, ~R*256 floats) ----
    sums = partials.sum(axis=-1).reshape(N, C, 2).sum(axis=0)   # (C, 2)
    count = jnp.float32(N * H * W)
    mean = sums[:, 0] / count
    var = jnp.maximum(sums[:, 1] / count - mean * mean, 0.0)    # biased var (training BN)
    scale_c = gamma.astype(jnp.float32) * jax.lax.rsqrt(var + EPS)
    bias_c = beta.astype(jnp.float32) - mean * scale_c
    scale_rows = jnp.tile(scale_c, N)                           # row r = n*C + c -> channel c
    bias_rows = jnp.tile(bias_c, N)

    # ---- pass 2: normalize (one read + one write of x) ----
    y3d = pl.pallas_call(
        _normalize_kernel,
        out_shape=jax.ShapeDtypeStruct((R, G, _LANES), x.dtype),
        grid=(R, S),
        in_specs=[
            pl.BlockSpec(memory_space=pltpu.MemorySpace.SMEM),   # scale per row
            pl.BlockSpec(memory_space=pltpu.MemorySpace.SMEM),   # bias per row
            pl.BlockSpec((None, TS, _LANES), lambda r, s: (r, s, 0)),
        ],
        out_specs=pl.BlockSpec((None, TS, _LANES), lambda r, s: (r, s, 0)),
        compiler_params=pltpu.CompilerParams(
            dimension_semantics=("parallel", "parallel"),
            vmem_limit_bytes=_VMEM_LIMIT,
        ),
    )(scale_rows, bias_rows, x3d)

    y2d = y3d.reshape(R, Lp)
    if Lp != L:
        y2d = y2d[:, :L]
    return y2d.reshape(N, C, H, W)              # free reshape back to NCHW


if __name__ == "__main__":
    key = jax.random.PRNGKey(0)
    N, C, H, W = 2, 3, 16, 16                   # BatchNorm2d(3) -> 3 channels
    x = jax.random.normal(key, (N, C, H, W), dtype=jnp.float32)

    # nn.BatchNorm2d default affine init
    gamma = jnp.ones((C,), dtype=jnp.float32)
    beta = jnp.zeros((C,), dtype=jnp.float32)

    y = batch_norm_forward(x, gamma, beta)
    jax.block_until_ready(y)

    # Pure-JAX reference (training-mode BN, biased variance)
    mean = jnp.mean(x, axis=(0, 2, 3), keepdims=True)
    var = jnp.mean((x - mean) ** 2, axis=(0, 2, 3), keepdims=True)
    ref = (x - mean) * jax.lax.rsqrt(var + EPS) * gamma.reshape(1, C, 1, 1) + beta.reshape(1, C, 1, 1)
    assert jnp.allclose(y, ref, atol=1e-4, rtol=1e-4), "mismatch vs reference"

    print("KERNEL_OK")
</pallas_src>

<mosaic_0001>
module attributes {stable_mosaic.version = 11 : i64} {
  func.func @_stats_kernel(%arg0: i32, %arg1: i32, %arg2: memref<1x2x128xf32, #tpu.memory_space<vmem>>, %arg3: memref<1x2x128xf32, #tpu.memory_space<vmem>>) attributes {dimension_semantics = [#tpu.dimension_semantics<parallel>, #tpu.dimension_semantics<arbitrary>], iteration_bounds = array<i64: 6, 1>, scalar_prefetch = 0 : i64, scratch_operands = 0 : i64, tpu.core_type = #tpu.core_type<tc>, window_params = [{transform_indices = @transform_0, window_bounds = array<i64: 1, 2, 128>}, {transform_indices = @transform_1, window_bounds = array<i64: 1, 2, 128>}]} {
    %c0_i32 = arith.constant 0 : i32
    %0 = arith.cmpi eq, %arg1, %c0_i32 : i32
    %1 = arith.extui %0 : i1 to i32
    %c0_i32_0 = arith.constant 0 : i32
    %2 = arith.cmpi ne, %1, %c0_i32_0 : i32
    scf.if %2 {
      %cst_15 = arith.constant 0.000000e+00 : f32
      %22 = vector.broadcast %cst_15 : f32 to vector<2x128xf32>
      %c0_16 = arith.constant 0 : index
      %c0_17 = arith.constant 0 : index
      %c0_18 = arith.constant 0 : index
      %23 = vector.load %arg3[%c0_16, %c0_17, %c0_18] : memref<1x2x128xf32, #tpu.memory_space<vmem>>, vector<1x2x128xf32>
      %24 = vector.shape_cast %23 : vector<1x2x128xf32> to vector<2x128xf32>
      %25 = vector.shape_cast %22 : vector<2x128xf32> to vector<1x2x128xf32>
      tpu.vector_store %arg3[%c0_16, %c0_17, %c0_18], %25 {strides = array<i32>} : memref<1x2x128xf32, #tpu.memory_space<vmem>>, vector<1x2x128xf32>,
    } else {
    }
    %c0 = arith.constant 0 : index
    %c0_1 = arith.constant 0 : index
    %c0_2 = arith.constant 0 : index
    %3 = vector.load %arg2[%c0, %c0_1, %c0_2] : memref<1x2x128xf32, #tpu.memory_space<vmem>>, vector<1x2x128xf32>
    %4 = vector.shape_cast %3 : vector<1x2x128xf32> to vector<2x128xf32>
    %c0_3 = arith.constant 0 : index
    %c0_4 = arith.constant 0 : index
    %c0_5 = arith.constant 0 : index
    %5 = vector.load %arg3[%c0_3, %c0_4, %c0_5] : memref<1x2x128xf32, #tpu.memory_space<vmem>>, vector<1x1x128xf32>
    %6 = vector.shape_cast %5 : vector<1x1x128xf32> to vector<1x128xf32>
    %cst = arith.constant dense<0.000000e+00> : vector<128xf32>
    %7 = vector.multi_reduction <add>, %4, %cst [0] : vector<2x128xf32> to vector<128xf32>
    %8 = vector.shape_cast %7 : vector<128xf32> to vector<1x128xf32>
    %9 = arith.addf %6, %8 : vector<1x128xf32>
    %c0_6 = arith.constant 0 : index
    %c0_7 = arith.constant 0 : index
    %c0_8 = arith.constant 0 : index
    %10 = vector.load %arg3[%c0_6, %c0_7, %c0_8] : memref<1x2x128xf32, #tpu.memory_space<vmem>>, vector<1x1x128xf32>
    %11 = vector.shape_cast %10 : vector<1x1x128xf32> to vector<1x128xf32>
    %12 = vector.shape_cast %9 : vector<1x128xf32> to vector<1x1x128xf32>
    tpu.vector_store %arg3[%c0_6, %c0_7, %c0_8], %12 {strides = array<i32>} : memref<1x2x128xf32, #tpu.memory_space<vmem>>, vector<1x1x128xf32>,
    %c0_9 = arith.constant 0 : index
    %c1 = arith.constant 1 : index
    %c0_10 = arith.constant 0 : index
    %13 = vector.load %arg3[%c0_9, %c1, %c0_10] : memref<1x2x128xf32, #tpu.memory_space<vmem>>, vector<1x1x128xf32>
    %14 = vector.shape_cast %13 : vector<1x1x128xf32> to vector<1x128xf32>
    %15 = arith.mulf %4, %4 : vector<2x128xf32>
    %cst_11 = arith.constant dense<0.000000e+00> : vector<128xf32>
    %16 = vector.multi_reduction <add>, %15, %cst_11 [0] : vector<2x128xf32> to vector<128xf32>
    %17 = vector.shape_cast %16 : vector<128xf32> to vector<1x128xf32>
    %18 = arith.addf %14, %17 : vector<1x128xf32>
    %c0_12 = arith.constant 0 : index
    %c1_13 = arith.constant 1 : index
    %c0_14 = arith.constant 0 : index
    %19 = vector.load %arg3[%c0_12, %c1_13, %c0_14] : memref<1x2x128xf32, #tpu.memory_space<vmem>>, vector<1x1x128xf32>
    %20 = vector.shape_cast %19 : vector<1x1x128xf32> to vector<1x128xf32>
    %21 = vector.shape_cast %18 : vector<1x128xf32> to vector<1x1x128xf32>
    tpu.vector_store %arg3[%c0_12, %c1_13, %c0_14], %21 {strides = array<i32>} : memref<1x2x128xf32, #tpu.memory_space<vmem>>, vector<1x1x128xf32>,
    return
  }
  func.func @transform_0(%arg0: i32, %arg1: i32) -> (i32, i32, i32) {
    %c0_i32 = arith.constant 0 : i32
    %c0_i32_0 = arith.constant 0 : i32
    return %arg0, %arg1, %c0_i32 : i32, i32, i32
  }
  func.func @transform_1(%arg0: i32, %arg1: i32) -> (i32, i32, i32) {
    %c0_i32 = arith.constant 0 : i32
    %c0_i32_0 = arith.constant 0 : i32
    %c0_i32_1 = arith.constant 0 : i32
    return %arg0, %c0_i32, %c0_i32_0 : i32, i32, i32
  }
}

</mosaic_0001>

<llo_original>
// kernel: tpu_custom_call.1
$region0: #{tpu_custom_call.1}
  #allocation0 [shape = 'u32[]', space=smem, size = 0x4, offset = 0x4, fixed_abs, tag = 'smem constant byte address 0x4 - core index']
  #allocation1 [shape = 'u32[144,128]{1,0:T(1,128)}', space=vmem, size = 0x12000, scoped, tag = 'internal scratch']
  %s0 = inlined_call_operand.hbm [shape: f32[6,2,128], index: 0, kind: input, shape index: {}]
  %s1 = inlined_call_operand.hbm [shape: f32[6,2,128], index: 1, kind: output, shape index: {}]
  %s2 = sld [smem:[#allocation0]]
  $region45: #{tpu_custom_call.1} parent=0
    _
  %s4 = ssub.s32 1, %s2
  %s5 = scalar_select 0, %s4, %s2
  $region1: #{tpu_custom_call.1} parent=0
    #allocation2 [shape = 'u8[2048]{0}', space=vmem, size = 0x800, scoped, tag = 'input window, operand 0']
    #allocation3 [shape = 's32[2]{0}', space=sflag, size = 0x8, scoped, tag = 'scoped memory for tpu_custom_call.1']
    #allocation4 [shape = 's32[2]{0}', space=sflag, size = 0x8, scoped, tag = 'scoped memory for tpu_custom_call.1']
    #allocation5 [shape = 'u8[2048]{0}', space=vmem, size = 0x800, scoped, tag = 'output window, operand 0']
    %6 = vsyncpa [#allocation3], 0
    %s7 = scalar_lea.sflag [#allocation3], 1
    %8 = vsyncpa %s7, 0
    %9 = vsyncpa [#allocation4], 0
    %s10 = scalar_lea.sflag [#allocation4], 1
    %11 = vsyncpa %s10, 0
    loop: start=0, step=1, limit=8
    $region2: #{tpu_custom_call.1} parent=1 // loop_pre_header
      _
    $region3: #{tpu_custom_call.1} parent=1 // loop_header
      %s13 = sphi 0, %s17
      %p14 = scmp.ge.s32.totalorder %s13, 8
      %s20 = sphi 0, %s32
      %s21 = sphi 0, %s28
      %s22 = sphi 0, %s20
      %s23 = sphi 0, %s21
      %s24 = sphi 0, %s22
      %s25 = sphi 0, %s23
      %s37 = sphi 0, %s39
      %s40 = sphi 0, %s37
      %s41 = sphi 0, %s40
      %s57 = sphi 0, %s41
      %s63 = sphi 0, %s65
      %s66 = sphi 0, %s63
      %s67 = sphi 0, %s66
      %s83 = sphi 0, %s67
    $region4: #{tpu_custom_call.1} parent=1 // loop_header_branch
      %16 = sbr.rel (%p14) target = $region8
    $region5: #{tpu_custom_call.1} parent=1 // loop_body
      %s18 = ssub.s32 %s13, 1
      %s19 = ssub.s32 %s13, 2
      %s26 = sadd.s32 1, %s21
      %p27 = scmp.ge.s32.totalorder %s26, 1
      %s28 = scalar_select %p27, 0, %s26
      %s29 = sadd.s32 1, %s20
      %s30 = scalar_select %p27, %s29, %s20
      %p31 = scmp.ge.s32.totalorder %s30, 6
      %s32 = scalar_select %p31, 0, %s30
      %s33 = ssub.s32 %s20, %s32
      %s34 = ssub.s32 %s21, %s28
      %s35 = sor.u32 %s33, %s34
      %p36 = scmp.eq.s32.totalorder %s35, 0
      %s38 = sadd.s32 %s37, 1
      %s39 = scalar_select %p36, %s37, %s38
      %p42 = pneg %p36
      %p43 = scmp.eq.s32.totalorder %s13, 5
      %p44 = por %p42, %p43
      %p45 = scmp.ne.s32.totalorder %s37, %s40
      %p46 = scmp.eq.s32.totalorder %s13, 0
      %p47 = por %p45, %p46
      %p48 = scmp.ne.s32.totalorder %s37, %s40
      %p49 = scmp.eq.s32.totalorder %s18, 5
      %p50 = por %p48, %p49
      %p51 = scmp.ne.s32.totalorder %s40, %s41
      %p52 = scmp.eq.s32.totalorder %s18, 0
      %p53 = por %p51, %p52
      %p54 = scmp.ne.s32.totalorder %s40, %s41
      %p55 = scmp.eq.s32.totalorder %s19, 5
      %p56 = por %p54, %p55
      %p58 = scmp.ne.s32.totalorder %s41, %s57
      %p59 = scmp.eq.s32.totalorder %s19, 0
      %p60 = por %p58, %p59
      %s61 = ssub.s32 %s20, %s32
      %p62 = scmp.eq.s32.totalorder %s61, 0
      %s64 = sadd.s32 %s63, 1
      %s65 = scalar_select %p62, %s63, %s64
      %p68 = pneg %p62
      %p69 = scmp.eq.s32.totalorder %s13, 5
      %p70 = por %p68, %p69
      %p71 = scmp.ne.s32.totalorder %s63, %s66
      %p72 = scmp.eq.s32.totalorder %s13, 0
      %p73 = por %p71, %p72
      %p74 = scmp.ne.s32.totalorder %s63, %s66
      %p75 = scmp.eq.s32.totalorder %s18, 5
      %p76 = por %p74, %p75
      %p77 = scmp.ne.s32.totalorder %s66, %s67
      %p78 = scmp.eq.s32.totalorder %s18, 0
      %p79 = por %p77, %p78
      %p80 = scmp.ne.s32.totalorder %s66, %s67
      %p81 = scmp.eq.s32.totalorder %s19, 5
      %p82 = por %p80, %p81
      %p84 = scmp.ne.s32.totalorder %s67, %s83
      %p85 = scmp.eq.s32.totalorder %s19, 0
      %p86 = por %p84, %p85
      %p87 = scmp.le.s32.totalorder 1, %s13
      %p88 = scmp.lt.s32.totalorder %s13, 7
      %p89 = pnand %p87, %p88
      %p90 = pneg %p89
      // Predicated region
      $region9: #{tpu_custom_call.1} parent=5 // pred_check
        _
      $region10: #{tpu_custom_call.1} parent=5 // pred_check_branch
        %92 = sbr.rel (%p89) target = $region12
      $region11: #{tpu_custom_call.1} parent=5 // pred_region
        %s93 = ssub.s32 %s13, 1
      $region12: #{tpu_custom_call.1} parent=5 // pred_fallthru
        _
      %p94 = scmp.lt.s32.totalorder %s13, 6
      // Predicated region
      $region13: #{tpu_custom_call.1} parent=5 // pred_check
        %p95 = pneg %p94
      $region14: #{tpu_custom_call.1} parent=5 // pred_check_branch
        %97 = sbr.rel (%p95) target = $region16
      $region15: #{tpu_custom_call.1} parent=5 // pred_region
        // Predicated region
        $region17: #{tpu_custom_call.1} parent=15 // pred_check
          %p98 = pneg %p47
        $region18: #{tpu_custom_call.1} parent=15 // pred_check_branch
          %100 = sbr.rel (%p98) target = $region20
        $region19: #{tpu_custom_call.1} parent=15 // pred_region
          %s101 = sand.u32 %s37, 1
          %s102 = scalar_lea.sflag [#allocation3], %s101
          %s103 = sand.u32 %s37, 1
          %s104 = smul.addr %s103, 2
          %s105 = scalar_lea.vmem [#allocation2], %s104
          %s107 = ssub.s32 32, 32
          %108 = vsyncadd %s102, %s107
          %s109 = sadd.s32 %s21, %s20
          %s110 = smul.addr %s109, 32
          %s111 = scalar_lea.hbm %s0, %s110
          %s113 = sshll.u32 %s105, 4
          %s114 = int_to_ptr.vmem [resolvable:$true] %s113
          %116 = dma.hbm_to_vmem [thread:$0]  %s111, 32, %s114, %s102
        $region20: #{tpu_custom_call.1} parent=15 // pred_fallthru
          _
      $region16: #{tpu_custom_call.1} parent=5 // pred_fallthru
        _
      %p117 = scmp.le.s32.totalorder 1, %s13
      %p118 = scmp.lt.s32.totalorder %s13, 7
      %p119 = pnand %p117, %p118
      %p120 = pneg %p119
      // Predicated region
      $region21: #{tpu_custom_call.1} parent=5 // pred_check
        _
      $region22: #{tpu_custom_call.1} parent=5 // pred_check_branch
        %122 = sbr.rel (%p119) target = $region24
      $region23: #{tpu_custom_call.1} parent=5 // pred_region
        %s123 = ssub.s32 %s13, 1
        %s124 = sand.u32 %s40, 1
        %s125 = scalar_lea.sflag [#allocation3], %s124
        %s126 = sand.u32 %s40, 1
        %s127 = smul.addr %s126, 2
        %s128 = scalar_lea.vmem [#allocation2], %s127
        // Predicated region
        $region25: #{tpu_custom_call.1} parent=23 // pred_check
          %p129 = pneg %p53
        $region26: #{tpu_custom_call.1} parent=23 // pred_check_branch
          %131 = sbr.rel (%p129) target = $region28
        $region27: #{tpu_custom_call.1} parent=23 // pred_region
          %132 = dma.done %s125, 32
        $region28: #{tpu_custom_call.1} parent=23 // pred_fallthru
          _
        %s133 = sand.u32 %s40, 1
        %s134 = scalar_lea.sflag [#allocation3], %s133
        %s135 = sand.u32 %s40, 1
        %s136 = smul.addr %s135, 2
        %s137 = scalar_lea.vmem [#allocation2], %s136
        %p138 = pneg %p53
        %p139 = pneg %p50
        %p140 = pneg %p79
        %p141 = pneg %p76
        %s142 = sand.u32 %s66, 1
        %s143 = scalar_lea.sflag [#allocation4], %s142
        %s144 = sand.u32 %s66, 1
        %s145 = smul.addr %s144, 2
        %s146 = scalar_lea.vmem [#allocation5], %s145
        %p147 = scmp.eq.s32.totalorder %s23, 0
        // Predicated region
        $region29: #{tpu_custom_call.1} parent=23 // pred_check
          %p148 = pneg %p147
        $region30: #{tpu_custom_call.1} parent=23 // pred_check_branch
          %150 = sbr.rel (%p148) target = $region32
        $region31: #{tpu_custom_call.1} parent=23 // pred_region
          %151 = vst [vmem:[%s146] sm:$0x3] 0.0
        $region32: #{tpu_custom_call.1} parent=23 // pred_fallthru
          _
        %v152 = vld [vmem:[%s128] sm:$0x3]
        %v153 = vld [vmem:[%s146] sm:$0x1]
        %vm154 = vcmask 1041408
        %v155 = vsel %vm154, %v152, 0.0
        %v156 = vrot.slane %v155, 4
        %v157 = vadd.f32 %v155, %v156
        %v158 = vrot.slane %v157, 2
        %v159 = vadd.f32 %v157, %v158
        %v160 = vrot.slane %v159, 1
        %v161 = vadd.f32 %v159, %v160
        %v162 = vadd.f32 %v153, %v161
        %163 = vst [vmem:[%s146] sm:$0x1] %v162
        %v164 = vld [vmem:[%s146 + $0x1] sm:$0x1]
        %v165 = vmul.f32 %v152, %v152
        %v166 = vsel %vm154, %v165, 0.0
        %v167 = vrot.slane %v166, 4
        %v168 = vadd.f32 %v166, %v167
        %v169 = vrot.slane %v168, 2
        %v170 = vadd.f32 %v168, %v169
        %v171 = vrot.slane %v170, 1
        %v172 = vadd.f32 %v170, %v171
        %v173 = vadd.f32 %v164, %v172
        %174 = vst [vmem:[%s146 + $0x1] sm:$0x1] %v173
        %s175 = sand.u32 %s66, 1
        %s176 = scalar_lea.sflag [#allocation4], %s175
        %s177 = sand.u32 %s66, 1
        %s178 = smul.addr %s177, 2
        %s179 = scalar_lea.vmem [#allocation5], %s178
        // Predicated region
        $region33: #{tpu_custom_call.1} parent=23 // pred_check
          %p180 = pneg %p76
        $region34: #{tpu_custom_call.1} parent=23 // pred_check_branch
          %182 = sbr.rel (%p180) target = $region36
        $region35: #{tpu_custom_call.1} parent=23 // pred_region
          %s184 = ssub.s32 32, 32
          %185 = vsyncadd %s176, %s184
          %s186 = smul.addr %s22, 32
          %s187 = scalar_lea.hbm %s1, %s186
          %s189 = sshll.u32 %s179, 4
          %s190 = int_to_ptr.vmem [resolvable:$true] %s189
          %192 = dma.vmem_to_hbm [thread:$0]  %s190, 32, %s187, %s176
        $region36: #{tpu_custom_call.1} parent=23 // pred_fallthru
          _
      $region24: #{tpu_custom_call.1} parent=5 // pred_fallthru
        _
      %p193 = scmp.le.s32.totalorder 2, %s13
      // Predicated region
      $region37: #{tpu_custom_call.1} parent=5 // pred_check
        %p194 = pneg %p193
      $region38: #{tpu_custom_call.1} parent=5 // pred_check_branch
        %196 = sbr.rel (%p194) target = $region40
      $region39: #{tpu_custom_call.1} parent=5 // pred_region
        %s197 = ssub.s32 %s13, 2
        // Predicated region
        $region41: #{tpu_custom_call.1} parent=39 // pred_check
          %p198 = pneg %p82
        $region42: #{tpu_custom_call.1} parent=39 // pred_check_branch
          %200 = sbr.rel (%p198) target = $region44
        $region43: #{tpu_custom_call.1} parent=39 // pred_region
          %s201 = sand.u32 %s67, 1
          %s202 = scalar_lea.sflag [#allocation4], %s201
          %s203 = sand.u32 %s67, 1
          %s204 = smul.addr %s203, 2
          %s205 = scalar_lea.vmem [#allocation5], %s204
          %206 = dma.done %s202, 32
        $region44: #{tpu_custom_call.1} parent=39 // pred_fallthru
          _
      $region40: #{tpu_custom_call.1} parent=5 // pred_fallthru
        _
    $region6: #{tpu_custom_call.1} parent=1 // loop_footer
      %s17 = sadd.s32 1, %s13
    $region7: #{tpu_custom_call.1} parent=1 // loop_footer_branch
      %12 = sbr.rel target = $region3
    $region8: #{tpu_custom_call.1} parent=1 // loop_exit
      _
    %207 = vsyncpa [#allocation3], 1
    %s208 = scalar_lea.sflag [#allocation3], 1
    %209 = vsyncpa %s208, 1
    %210 = vsyncpa [#allocation4], 1
    %s211 = scalar_lea.sflag [#allocation4], 1
    %212 = vsyncpa %s211, 1

</llo_original>
